<compile_context>
chip_gen: v7x
topology: tpu7x:2x2x1
jax: 0.10.0
libtpu: 0.0.40
codegen_flags: <defaults>
</compile_context>

<pallas_src>
import functools

import jax
import jax.numpy as jnp
from jax.experimental import pallas as pl
from jax.experimental.pallas import tpu as pltpu


def _channel_attention_kernel(x_ref, w1_ref, w2_ref, o_ref, sum_ref, max_ref, *,
                              hw_total, hw_tile, bn, needs_mask):
    # x_ref  : (bN, C, T)  spatial tile of bN batch elements
    #                      (C on sublanes, spatial positions on the lane axis)
    # w1_ref : (Cr, C)     fc1 1x1-conv weight
    # w2_ref : (C, Cr)     fc2 1x1-conv weight
    # o_ref  : (bN, C, 1)  sigmoid(mlp(avg) + mlp(max)) per batch element
    # sum_ref/max_ref: (C, bN) f32 accumulators, persistent across the hw axis
    hw_id = pl.program_id(1)
    last_hw = pl.num_programs(1) - 1

    @pl.when(hw_id == 0)
    def _init():
        sum_ref[...] = jnp.zeros_like(sum_ref)
        max_ref[...] = jnp.full(max_ref.shape, -jnp.inf, dtype=max_ref.dtype)

    def _accumulate(masked):
        if masked:
            # Only the last tile can run past H*W; neutralize padded columns.
            col = (jax.lax.broadcasted_iota(jnp.int32, (x_ref.shape[1], hw_tile), 1)
                   + hw_id * hw_tile)
            valid = col < hw_total
        for b in range(bn):
            xb = x_ref[b].astype(jnp.float32)                       # (C, T)
            if masked:
                xs = jnp.where(valid, xb, 0.0)
                xm = jnp.where(valid, xb, -jnp.inf)
            else:
                xs = xb
                xm = xb
            # Lane-axis partial reductions -> tiny (C, 1) accumulator columns.
            sum_ref[:, b:b + 1] += jnp.sum(xs, axis=-1, keepdims=True)
            max_ref[:, b:b + 1] = jnp.maximum(
                max_ref[:, b:b + 1], jnp.max(xm, axis=-1, keepdims=True))

    if needs_mask:
        @pl.when(hw_id < last_hw)
        def _steady():
            _accumulate(False)

        @pl.when(hw_id == last_hw)
        def _tail():
            _accumulate(True)
    else:
        _accumulate(False)

    @pl.when(hw_id == last_hw)
    def _finalize():
        avg = sum_ref[...] * (1.0 / hw_total)                        # (C, bN)
        pooled = jnp.concatenate([avg, max_ref[...]], axis=-1)       # (C, 2*bN)
        w1 = w1_ref[...].astype(jnp.float32)                         # (Cr, C)
        w2 = w2_ref[...].astype(jnp.float32)                         # (C, Cr)
        h = jnp.dot(w1, pooled, preferred_element_type=jnp.float32)  # (Cr, 2*bN)
        h = jnp.maximum(h, 0.0)                                      # ReLU
        y = jnp.dot(w2, h, preferred_element_type=jnp.float32)       # (C, 2*bN)
        att = jax.nn.sigmoid(y[:, :bn] + y[:, bn:])                  # (C, bN)
        for b in range(bn):
            o_ref[b] = att[:, b:b + 1].astype(o_ref.dtype)


def channel_attention(x, w1, w2, *, block_bytes=4 * 1024 * 1024, max_batch_fold=8):
    """CBAM ChannelAttention forward.

    x : (N, C, H, W)  NCHW input (same layout as PyTorch)
    w1: (C//r, C)     fc1 1x1-conv weight (squeezed, no bias)
    w2: (C, C//r)     fc2 1x1-conv weight (squeezed, no bias)
    returns (N, C, 1, 1) sigmoid attention map.
    """
    N, C, H, W = x.shape
    Cr = w1.shape[0]
    HW = H * W
    itemsize = x.dtype.itemsize

    # Free reshape of the contiguous NCHW buffer -- no extra HBM pass.
    x3 = x.reshape(N, C, HW)

    # Byte-budgeted spatial tile: HW on the lane axis (multiple of 128 when
    # tiled), full C on sublanes. If the whole image fits in one tile, fold a
    # few batch elements into the block instead so tiny-HW layers are not
    # per-step-overhead bound.
    max_cols = max(128, ((block_bytes // (C * itemsize)) // 128) * 128)
    if HW <= max_cols:
        t_hw = HW
        n_hw = 1
        per_image = C * HW * itemsize
        bn = int(max(1, min(N, max_batch_fold, block_bytes // max(1, per_image))))
    else:
        t_hw = max_cols
        n_hw = pl.cdiv(HW, t_hw)
        bn = 1
    needs_mask = (HW % t_hw) != 0
    n_b = pl.cdiv(N, bn)

    kernel = functools.partial(
        _channel_attention_kernel,
        hw_total=HW, hw_tile=t_hw, bn=bn, needs_mask=needs_mask)

    out = pl.pallas_call(
        kernel,
        out_shape=jax.ShapeDtypeStruct((N, C, 1), x.dtype),
        grid=(n_b, n_hw),
        in_specs=[
            pl.BlockSpec((bn, C, t_hw), lambda nb, h: (nb, 0, h)),   # x tile
            pl.BlockSpec((Cr, C), lambda nb, h: (0, 0)),             # fc1 (resident)
            pl.BlockSpec((C, Cr), lambda nb, h: (0, 0)),             # fc2 (resident)
        ],
        out_specs=pl.BlockSpec((bn, C, 1), lambda nb, h: (nb, 0, 0)),
        scratch_shapes=[
            pltpu.VMEM((C, bn), jnp.float32),   # running per-batch sum
            pltpu.VMEM((C, bn), jnp.float32),   # running per-batch max
        ],
        compiler_params=pltpu.CompilerParams(
            dimension_semantics=("parallel", "arbitrary")),
    )(x3, w1, w2)
    return out.reshape(N, C, 1, 1)


def channel_attention_ref(x, w1, w2):
    # Pure-JAX reference mirroring the PyTorch forward.
    avg = jnp.mean(x, axis=(2, 3))                    # (N, C)
    mx = jnp.max(x, axis=(2, 3))                      # (N, C)

    def mlp(v):
        h = jnp.maximum(v @ w1.T, 0.0)
        return h @ w2.T

    out = jax.nn.sigmoid(mlp(avg) + mlp(mx))
    return out.reshape(*out.shape, 1, 1)


if __name__ == "__main__":
    # in_channels=32, reduction_ratio=4 -> hidden channels = 8
    N, C, H, W = 2, 32, 16, 16
    reduction_ratio = 4
    Cr = C // reduction_ratio

    key = jax.random.PRNGKey(0)
    kx, k1, k2, kx2 = jax.random.split(key, 4)
    x = jax.random.normal(kx, (N, C, H, W), dtype=jnp.float32)
    # Deterministic "kaiming-ish" init for the 1x1 conv weights (no bias).
    w1 = jax.random.normal(k1, (Cr, C), dtype=jnp.float32) * (2.0 / C) ** 0.5
    w2 = jax.random.normal(k2, (C, Cr), dtype=jnp.float32) * (2.0 / Cr) ** 0.5

    ref = channel_attention_ref(x, w1, w2)

    # Default path: HW fits one tile, batch elements folded (bN=2, grid (1,1)).
    out = jax.block_until_ready(channel_attention(x, w1, w2))
    assert out.shape == (N, C, 1, 1)
    assert jnp.allclose(out, ref, atol=1e-5, rtol=1e-5)

    # Forced streaming path: tiny byte budget -> t_hw=128, 2 reduction steps.
    out2 = jax.block_until_ready(channel_attention(x, w1, w2, block_bytes=16384))
    assert jnp.allclose(out2, ref, atol=1e-5, rtol=1e-5)

    # Ragged-tail path: 15x15 -> HW=225 = 128 + 97, last tile masked in-kernel.
    x15 = jax.random.normal(kx2, (N, C, 15, 15), dtype=jnp.float32)
    ref15 = channel_attention_ref(x15, w1, w2)
    out3 = jax.block_until_ready(channel_attention(x15, w1, w2, block_bytes=16384))
    assert jnp.allclose(out3, ref15, atol=1e-5, rtol=1e-5)

    print("KERNEL_OK")
</pallas_src>

<mosaic_0001>
module attributes {stable_mosaic.version = 11 : i64} {
  func.func @_channel_attention_kernel(%arg0: i32, %arg1: i32, %arg2: memref<2x32x256xf32, #tpu.memory_space<vmem>>, %arg3: memref<8x32xf32, #tpu.memory_space<vmem>>, %arg4: memref<32x8xf32, #tpu.memory_space<vmem>>, %arg5: memref<2x32x1xf32, #tpu.memory_space<vmem>>, %arg6: memref<32x2xf32, #tpu.memory_space<vmem>>, %arg7: memref<32x2xf32, #tpu.memory_space<vmem>>) attributes {dimension_semantics = [#tpu.dimension_semantics<parallel>, #tpu.dimension_semantics<arbitrary>], iteration_bounds = array<i64: 1, 1>, scalar_prefetch = 0 : i64, scratch_operands = 2 : i64, tpu.core_type = #tpu.core_type<tc>, window_params = [{transform_indices = @transform_0, window_bounds = array<i64: 2, 32, 256>}, {pipeline_mode = #tpu.pipeline_mode<synchronous>, transform_indices = @transform_1, window_bounds = array<i64: 8, 32>}, {pipeline_mode = #tpu.pipeline_mode<synchronous>, transform_indices = @transform_2, window_bounds = array<i64: 32, 8>}, {transform_indices = @transform_3, window_bounds = array<i64: 2, 32, 1>}]} {
    %c0_i32 = arith.constant 0 : i32
    %0 = arith.cmpi eq, %arg1, %c0_i32 : i32
    %1 = arith.extui %0 : i1 to i32
    %c0_i32_0 = arith.constant 0 : i32
    %2 = arith.cmpi ne, %1, %c0_i32_0 : i32
    scf.if %2 {
      %cst_26 = arith.constant 0.000000e+00 : f32
      %30 = vector.broadcast %cst_26 : f32 to vector<32x2xf32>
      %c0_27 = arith.constant 0 : index
      %c0_28 = arith.constant 0 : index
      %31 = vector.load %arg6[%c0_27, %c0_28] : memref<32x2xf32, #tpu.memory_space<vmem>>, vector<32x2xf32>
      tpu.vector_store %arg6[%c0_27, %c0_28], %30 {strides = array<i32>} : memref<32x2xf32, #tpu.memory_space<vmem>>, vector<32x2xf32>,
      %cst_29 = arith.constant 0xFF800000 : f32
      %32 = vector.broadcast %cst_29 : f32 to vector<32x2xf32>
      %c0_30 = arith.constant 0 : index
      %c0_31 = arith.constant 0 : index
      %33 = vector.load %arg7[%c0_30, %c0_31] : memref<32x2xf32, #tpu.memory_space<vmem>>, vector<32x2xf32>
      tpu.vector_store %arg7[%c0_30, %c0_31], %32 {strides = array<i32>} : memref<32x2xf32, #tpu.memory_space<vmem>>, vector<32x2xf32>,
    } else {
    }
    %c0 = arith.constant 0 : index
    %c0_1 = arith.constant 0 : index
    %c0_2 = arith.constant 0 : index
    %3 = vector.load %arg2[%c0, %c0_1, %c0_2] : memref<2x32x256xf32, #tpu.memory_space<vmem>>, vector<1x32x256xf32>
    %4 = vector.shape_cast %3 : vector<1x32x256xf32> to vector<32x256xf32>
    %c0_3 = arith.constant 0 : index
    %c0_4 = arith.constant 0 : index
    %5 = vector.load %arg6[%c0_3, %c0_4] : memref<32x2xf32, #tpu.memory_space<vmem>>, vector<32x1xf32>
    %cst = arith.constant dense<0.000000e+00> : vector<32xf32>
    %6 = vector.multi_reduction <add>, %4, %cst [1] : vector<32x256xf32> to vector<32xf32>
    %7 = vector.shape_cast %6 : vector<32xf32> to vector<32x1xf32>
    %8 = arith.addf %5, %7 : vector<32x1xf32>
    %c0_5 = arith.constant 0 : index
    %c0_6 = arith.constant 0 : index
    %9 = vector.load %arg6[%c0_5, %c0_6] : memref<32x2xf32, #tpu.memory_space<vmem>>, vector<32x1xf32>
    tpu.vector_store %arg6[%c0_5, %c0_6], %8 {strides = array<i32>} : memref<32x2xf32, #tpu.memory_space<vmem>>, vector<32x1xf32>,
    %c0_7 = arith.constant 0 : index
    %c0_8 = arith.constant 0 : index
    %10 = vector.load %arg7[%c0_7, %c0_8] : memref<32x2xf32, #tpu.memory_space<vmem>>, vector<32x1xf32>
    %cst_9 = arith.constant dense<0xFF800000> : vector<32xf32>
    %11 = vector.multi_reduction <maximumf>, %4, %cst_9 [1] : vector<32x256xf32> to vector<32xf32>
    %12 = vector.shape_cast %11 : vector<32xf32> to vector<32x1xf32>
    %13 = arith.maximumf %10, %12 : vector<32x1xf32>
    %c0_10 = arith.constant 0 : index
    %c0_11 = arith.constant 0 : index
    %14 = vector.load %arg7[%c0_10, %c0_11] : memref<32x2xf32, #tpu.memory_space<vmem>>, vector<32x1xf32>
    tpu.vector_store %arg7[%c0_10, %c0_11], %13 {strides = array<i32>} : memref<32x2xf32, #tpu.memory_space<vmem>>, vector<32x1xf32>,
    %c1 = arith.constant 1 : index
    %c0_12 = arith.constant 0 : index
    %c0_13 = arith.constant 0 : index
    %15 = vector.load %arg2[%c1, %c0_12, %c0_13] : memref<2x32x256xf32, #tpu.memory_space<vmem>>, vector<1x32x256xf32>
    %16 = vector.shape_cast %15 : vector<1x32x256xf32> to vector<32x256xf32>
    %c0_14 = arith.constant 0 : index
    %c1_15 = arith.constant 1 : index
    %17 = vector.load %arg6[%c0_14, %c1_15] : memref<32x2xf32, #tpu.memory_space<vmem>>, vector<32x1xf32>
    %cst_16 = arith.constant dense<0.000000e+00> : vector<32xf32>
    %18 = vector.multi_reduction <add>, %16, %cst_16 [1] : vector<32x256xf32> to vector<32xf32>
    %19 = vector.shape_cast %18 : vector<32xf32> to vector<32x1xf32>
    %20 = arith.addf %17, %19 : vector<32x1xf32>
    %c0_17 = arith.constant 0 : index
    %c1_18 = arith.constant 1 : index
    %21 = vector.load %arg6[%c0_17, %c1_18] : memref<32x2xf32, #tpu.memory_space<vmem>>, vector<32x1xf32>
    tpu.vector_store %arg6[%c0_17, %c1_18], %20 {strides = array<i32>} : memref<32x2xf32, #tpu.memory_space<vmem>>, vector<32x1xf32>,
    %c0_19 = arith.constant 0 : index
    %c1_20 = arith.constant 1 : index
    %22 = vector.load %arg7[%c0_19, %c1_20] : memref<32x2xf32, #tpu.memory_space<vmem>>, vector<32x1xf32>
    %cst_21 = arith.constant dense<0xFF800000> : vector<32xf32>
    %23 = vector.multi_reduction <maximumf>, %16, %cst_21 [1] : vector<32x256xf32> to vector<32xf32>
    %24 = vector.shape_cast %23 : vector<32xf32> to vector<32x1xf32>
    %25 = arith.maximumf %22, %24 : vector<32x1xf32>
    %c0_22 = arith.constant 0 : index
    %c1_23 = arith.constant 1 : index
    %26 = vector.load %arg7[%c0_22, %c1_23] : memref<32x2xf32, #tpu.memory_space<vmem>>, vector<32x1xf32>
    tpu.vector_store %arg7[%c0_22, %c1_23], %25 {strides = array<i32>} : memref<32x2xf32, #tpu.memory_space<vmem>>, vector<32x1xf32>,
    %c0_i32_24 = arith.constant 0 : i32
    %27 = arith.cmpi eq, %arg1, %c0_i32_24 : i32
    %28 = arith.extui %27 : i1 to i32
    %c0_i32_25 = arith.constant 0 : i32
    %29 = arith.cmpi ne, %28, %c0_i32_25 : i32
    scf.if %29 {
      %c0_26 = arith.constant 0 : index
      %c0_27 = arith.constant 0 : index
      %30 = vector.load %arg6[%c0_26, %c0_27] : memref<32x2xf32, #tpu.memory_space<vmem>>, vector<32x2xf32>
      %cst_28 = arith.constant 3.906250e-03 : f32
      %31 = vector.broadcast %cst_28 : f32 to vector<32x2xf32>
      %32 = arith.mulf %30, %31 : vector<32x2xf32>
      %c0_29 = arith.constant 0 : index
      %c0_30 = arith.constant 0 : index
      %33 = vector.load %arg7[%c0_29, %c0_30] : memref<32x2xf32, #tpu.memory_space<vmem>>, vector<32x2xf32>
      %34 = tpu.concatenate %32, %33 in 1 : vector<32x2xf32>, vector<32x2xf32> -> vector<32x4xf32>
      %c0_31 = arith.constant 0 : index
      %c0_32 = arith.constant 0 : index
      %35 = vector.load %arg3[%c0_31, %c0_32] : memref<8x32xf32, #tpu.memory_space<vmem>>, vector<8x32xf32>
      %c0_33 = arith.constant 0 : index
      %c0_34 = arith.constant 0 : index
      %36 = vector.load %arg4[%c0_33, %c0_34] : memref<32x8xf32, #tpu.memory_space<vmem>>, vector<32x8xf32>
      %cst_35 = arith.constant dense<0.000000e+00> : vector<8x4xf32>
      %37 = tpu.matmul %35, %34, %cst_35 {dimension_numbers = #tpu.dot_dimension_numbers<[1], [0], [0], [1], [0, 0, 1, 1], [], []>} : vector<8x32xf32>, vector<32x4xf32>, vector<8x4xf32> -> vector<8x4xf32>
      %cst_36 = arith.constant 0.000000e+00 : f32
      %38 = vector.broadcast %cst_36 : f32 to vector<8x4xf32>
      %39 = arith.maximumf %37, %38 : vector<8x4xf32>
      %cst_37 = arith.constant dense<0.000000e+00> : vector<32x4xf32>
      %40 = tpu.matmul %36, %39, %cst_37 {dimension_numbers = #tpu.dot_dimension_numbers<[1], [0], [0], [1], [0, 0, 1, 1], [], []>} : vector<32x8xf32>, vector<8x4xf32>, vector<32x4xf32> -> vector<32x4xf32>
      %41 = vector.extract_strided_slice %40 {offsets = [0, 0], sizes = [32, 2], strides = [1, 1]} : vector<32x4xf32> to vector<32x2xf32>
      %42 = vector.extract_strided_slice %40 {offsets = [0, 2], sizes = [32, 2], strides = [1, 1]} : vector<32x4xf32> to vector<32x2xf32>
      %43 = arith.addf %41, %42 : vector<32x2xf32>
      %44 = arith.negf %43 : vector<32x2xf32>
      %45 = math.exp %44 : vector<32x2xf32>
      %cst_38 = arith.constant 1.000000e+00 : f32
      %46 = vector.broadcast %cst_38 : f32 to vector<32x2xf32>
      %47 = arith.addf %46, %45 : vector<32x2xf32>
      %48 = arith.divf %46, %47 : vector<32x2xf32>
      %49 = vector.extract_strided_slice %48 {offsets = [0, 0], sizes = [32, 1], strides = [1, 1]} : vector<32x2xf32> to vector<32x1xf32>
      %c0_39 = arith.constant 0 : index
      %c0_40 = arith.constant 0 : index
      %c0_41 = arith.constant 0 : index
      %50 = vector.load %arg5[%c0_39, %c0_40, %c0_41] : memref<2x32x1xf32, #tpu.memory_space<vmem>>, vector<1x32x1xf32>
      %51 = vector.shape_cast %50 : vector<1x32x1xf32> to vector<32x1xf32>
      %52 = vector.shape_cast %49 : vector<32x1xf32> to vector<1x32x1xf32>
      tpu.vector_store %arg5[%c0_39, %c0_40, %c0_41], %52 {strides = array<i32>} : memref<2x32x1xf32, #tpu.memory_space<vmem>>, vector<1x32x1xf32>,
      %53 = vector.extract_strided_slice %48 {offsets = [0, 1], sizes = [32, 1], strides = [1, 1]} : vector<32x2xf32> to vector<32x1xf32>
      %c1_42 = arith.constant 1 : index
      %c0_43 = arith.constant 0 : index
      %c0_44 = arith.constant 0 : index
      %54 = vector.load %arg5[%c1_42, %c0_43, %c0_44] : memref<2x32x1xf32, #tpu.memory_space<vmem>>, vector<1x32x1xf32>
      %55 = vector.shape_cast %54 : vector<1x32x1xf32> to vector<32x1xf32>
      %56 = vector.shape_cast %53 : vector<32x1xf32> to vector<1x32x1xf32>
      tpu.vector_store %arg5[%c1_42, %c0_43, %c0_44], %56 {strides = array<i32>} : memref<2x32x1xf32, #tpu.memory_space<vmem>>, vector<1x32x1xf32>,
    } else {
    }
    return
  }
  func.func @transform_0(%arg0: i32, %arg1: i32) -> (i32, i32, i32) {
    %c0_i32 = arith.constant 0 : i32
    %c0_i32_0 = arith.constant 0 : i32
    return %arg0, %c0_i32, %arg1 : i32, i32, i32
  }
  func.func @transform_1(%arg0: i32, %arg1: i32) -> (i32, i32) {
    %c0_i32 = arith.constant 0 : i32
    %c0_i32_0 = arith.constant 0 : i32
    %c0_i32_1 = arith.constant 0 : i32
    return %c0_i32, %c0_i32_0 : i32, i32
  }
  func.func @transform_2(%arg0: i32, %arg1: i32) -> (i32, i32) {
    %c0_i32 = arith.constant 0 : i32
    %c0_i32_0 = arith.constant 0 : i32
    %c0_i32_1 = arith.constant 0 : i32
    return %c0_i32, %c0_i32_0 : i32, i32
  }
  func.func @transform_3(%arg0: i32, %arg1: i32) -> (i32, i32, i32) {
    %c0_i32 = arith.constant 0 : i32
    %c0_i32_0 = arith.constant 0 : i32
    %c0_i32_1 = arith.constant 0 : i32
    return %arg0, %c0_i32, %c0_i32_0 : i32, i32, i32
  }
}

</mosaic_0001>

<llo_original>
// kernel: tpu_custom_call.1
$region0: #{tpu_custom_call.1}
  #allocation0 [shape = 'u32[]', space=smem, size = 0x4, offset = 0x4, fixed_abs, tag = 'smem constant byte address 0x4 - core index']
  #allocation1 [shape = 'u32[144,128]{1,0:T(1,128)}', space=vmem, size = 0x12000, scoped, tag = 'internal scratch']
  #allocation2 [shape = 'f32[32,2]{1,0:T(8,128)}', space=vmem, size = 0x4000, scoped, tag = 'scratch operand']
  #allocation3 [shape = 'f32[32,2]{1,0:T(8,128)}', space=vmem, size = 0x4000, scoped, tag = 'scratch operand']
  %s0 = inlined_call_operand.hbm [shape: f32[2,32,256], index: 0, kind: input, shape index: {}]
  %s1 = inlined_call_operand.vmem [shape: f32[8,32], index: 1, kind: input, shape index: {}]
  %s2 = inlined_call_operand.vmem [shape: f32[32,8], index: 2, kind: input, shape index: {}]
  %s3 = inlined_call_operand.vmem [shape: f32[2,32,1], index: 3, kind: output, shape index: {}]
  %s4 = sld [smem:[#allocation0]]
  $region34: #{tpu_custom_call.1} parent=0
    _
  %s6 = ssub.s32 1, %s4
  %s7 = scalar_select 0, %s6, %s4
  $region1: #{tpu_custom_call.1} parent=0
    #allocation4 [shape = 'u8[65536]{0}', space=vmem, size = 0x10000, scoped, tag = 'input window, operand 0, single buffered']
    #allocation5 [shape = 's32[1]{0}', space=sflag, size = 0x4, scoped, tag = 'scoped memory for tpu_custom_call.1']
    %8 = vsyncpa [#allocation5], 0
    // Predicated region
    $region2: #{tpu_custom_call.1} parent=1 // pred_check
      _
    $region3: #{tpu_custom_call.1} parent=1 // pred_check_branch
      %10 = sbr.rel (0) target = $region5
    $region4: #{tpu_custom_call.1} parent=1 // pred_region
      %s12 = ssub.s32 2048, 2048
      %13 = vsyncadd [#allocation5], %s12
      %s14 = sshll.u32 [#allocation4], 4
      %s15 = int_to_ptr.vmem [resolvable:$true] %s14
      %20 = dma.hbm_to_vmem [thread:$0]  %s0, 2048, %s15, [#allocation5], 256, 256, 16
    $region5: #{tpu_custom_call.1} parent=1 // pred_fallthru
      _
    // Predicated region
    $region6: #{tpu_custom_call.1} parent=1 // pred_check
      _
    $region7: #{tpu_custom_call.1} parent=1 // pred_check_branch
      %22 = sbr.rel (0) target = $region9
    $region8: #{tpu_custom_call.1} parent=1 // pred_region
      _
    $region9: #{tpu_custom_call.1} parent=1 // pred_fallthru
      _
    // Predicated region
    $region10: #{tpu_custom_call.1} parent=1 // pred_check
      _
    $region11: #{tpu_custom_call.1} parent=1 // pred_check_branch
      %24 = sbr.rel (0) target = $region13
    $region12: #{tpu_custom_call.1} parent=1 // pred_region
      _
    $region13: #{tpu_custom_call.1} parent=1 // pred_fallthru
      _
    // Predicated region
    $region14: #{tpu_custom_call.1} parent=1 // pred_check
      _
    $region15: #{tpu_custom_call.1} parent=1 // pred_check_branch
      %26 = sbr.rel (0) target = $region17
    $region16: #{tpu_custom_call.1} parent=1 // pred_region
      %27 = dma.done [#allocation5], 2048
    $region17: #{tpu_custom_call.1} parent=1 // pred_fallthru
      _
    %p28 = scmp.eq.s32.totalorder 0, 0
    // Predicated region
    $region18: #{tpu_custom_call.1} parent=1 // pred_check
      %p29 = pneg %p28
    $region19: #{tpu_custom_call.1} parent=1 // pred_check_branch
      %31 = sbr.rel (%p29) target = $region21
    $region20: #{tpu_custom_call.1} parent=1 // pred_region
      %vm32 = vcmask 15360
      %33 = vst.msk [vmem:[#allocation2] sm:$0xff] %vm32, 0.0
      %34 = vst.msk [vmem:[#allocation2 + $0x8] sm:$0xff] %vm32, 0.0
      %35 = vst.msk [vmem:[#allocation2 + $0x10] sm:$0xff] %vm32, 0.0
      %36 = vst.msk [vmem:[#allocation2 + $0x18] sm:$0xff] %vm32, 0.0
      %37 = vst.msk [vmem:[#allocation3] sm:$0xff] %vm32, -inf
      %38 = vst.msk [vmem:[#allocation3 + $0x8] sm:$0xff] %vm32, -inf
      %39 = vst.msk [vmem:[#allocation3 + $0x10] sm:$0xff] %vm32, -inf
      %40 = vst.msk [vmem:[#allocation3 + $0x18] sm:$0xff] %vm32, -inf
    $region21: #{tpu_custom_call.1} parent=1 // pred_fallthru
      _
    %v41 = vld [vmem:[#allocation4] sm:$0xff]
    %v42 = vld [vmem:[#allocation4 + $0x8] sm:$0xff]
    %v43 = vld [vmem:[#allocation4 + $0x10] sm:$0xff]
    %v44 = vld [vmem:[#allocation4 + $0x18] sm:$0xff]
    %v45 = vld [vmem:[#allocation4 + $0x20] sm:$0xff]
    %v46 = vld [vmem:[#allocation4 + $0x28] sm:$0xff]
    %v47 = vld [vmem:[#allocation4 + $0x30] sm:$0xff]
    %v48 = vld [vmem:[#allocation4 + $0x38] sm:$0xff]
    %v49 = vld [vmem:[#allocation2] sm:$0xff]
    %v50 = vld [vmem:[#allocation2 + $0x8] sm:$0xff]
    %v51 = vld [vmem:[#allocation2 + $0x10] sm:$0xff]
    %v52 = vld [vmem:[#allocation2 + $0x18] sm:$0xff]
    %v53 = vadd.f32 %v41, %v42
    %54 = vadd.xlane.f32.xlu0 %v53
    %v55 = vpop.xlane.xlu0 %54
    %v56 = vadd.f32 %v43, %v44
    %57 = vadd.xlane.f32.xlu0 %v56
    %v58 = vpop.xlane.xlu0 %57
    %v59 = vadd.f32 %v45, %v46
    %60 = vadd.xlane.f32.xlu0 %v59
    %v61 = vpop.xlane.xlu0 %60
    %v62 = vadd.f32 %v47, %v48
    %63 = vadd.xlane.f32.xlu0 %v62
    %v64 = vpop.xlane.xlu0 %63
    %v65 = vadd.f32 %v49, %v55
    %v66 = vadd.f32 %v50, %v58
    %v67 = vadd.f32 %v51, %v61
    %v68 = vadd.f32 %v52, %v64
    %vm69 = vcmask 7168
    %70 = vst.msk [vmem:[#allocation2] sm:$0xff] %vm69, %v65
    %71 = vst.msk [vmem:[#allocation2 + $0x8] sm:$0xff] %vm69, %v66
    %72 = vst.msk [vmem:[#allocation2 + $0x10] sm:$0xff] %vm69, %v67
    %73 = vst.msk [vmem:[#allocation2 + $0x18] sm:$0xff] %vm69, %v68
    %v74 = vld [vmem:[#allocation3] sm:$0xff]
    %v75 = vld [vmem:[#allocation3 + $0x8] sm:$0xff]
    %v76 = vld [vmem:[#allocation3 + $0x10] sm:$0xff]
    %v77 = vld [vmem:[#allocation3 + $0x18] sm:$0xff]
    %v78 = vmax.f32 %v41, %v42
    %79 = vmax.xlane.f32.xlu0 %v78
    %v80 = vpop.xlane.xlu0 %79
    %v81 = vmax.f32 %v43, %v44
    %82 = vmax.xlane.f32.xlu0 %v81
    %v83 = vpop.xlane.xlu0 %82
    %v84 = vmax.f32 %v45, %v46
    %85 = vmax.xlane.f32.xlu0 %v84
    %v86 = vpop.xlane.xlu0 %85
    %v87 = vmax.f32 %v47, %v48
    %88 = vmax.xlane.f32.xlu0 %v87
    %v89 = vpop.xlane.xlu0 %88
    %v90 = vmax.f32 %v74, %v80
    %v91 = vmax.f32 %v75, %v83
    %v92 = vmax.f32 %v76, %v86
    %v93 = vmax.f32 %v77, %v89
    %94 = vst.msk [vmem:[#allocation3] sm:$0xff] %vm69, %v90
    %95 = vst.msk [vmem:[#allocation3 + $0x8] sm:$0xff] %vm69, %v91
    %96 = vst.msk [vmem:[#allocation3 + $0x10] sm:$0xff] %vm69, %v92
    %97 = vst.msk [vmem:[#allocation3 + $0x18] sm:$0xff] %vm69, %v93
    %s98 = scalar_lea.vmem [#allocation4], 64
    %v99 = vld [vmem:[%s98] sm:$0xff]
    %v100 = vld [vmem:[%s98 + $0x8] sm:$0xff]
    %v101 = vld [vmem:[%s98 + $0x10] sm:$0xff]
    %v102 = vld [vmem:[%s98 + $0x18] sm:$0xff]
    %v103 = vld [vmem:[%s98 + $0x20] sm:$0xff]
    %v104 = vld [vmem:[%s98 + $0x28] sm:$0xff]
    %v105 = vld [vmem:[%s98 + $0x30] sm:$0xff]
    %v106 = vld [vmem:[%s98 + $0x38] sm:$0xff]
    %v107 = vld [vmem:[#allocation2] sm:$0xff]
    %v108 = vld [vmem:[#allocation2 + $0x8] sm:$0xff]
    %v109 = vld [vmem:[#allocation2 + $0x10] sm:$0xff]
    %v110 = vld [vmem:[#allocation2 + $0x18] sm:$0xff]
    %v111 = vadd.f32 %v99, %v100
    %112 = vadd.xlane.f32.xlu0 %v111
    %v113 = vpop.xlane.xlu0 %112
    %v114 = vadd.f32 %v101, %v102
    %115 = vadd.xlane.f32.xlu0 %v114
    %v116 = vpop.xlane.xlu0 %115
    %v117 = vadd.f32 %v103, %v104
    %118 = vadd.xlane.f32.xlu0 %v117
    %v119 = vpop.xlane.xlu0 %118
    %v120 = vadd.f32 %v105, %v106
    %121 = vadd.xlane.f32.xlu0 %v120
    %v122 = vpop.xlane.xlu0 %121
    %v123 = vadd.f32 %v107, %v113
    %v124 = vadd.f32 %v108, %v116
    %v125 = vadd.f32 %v109, %v119
    %v126 = vadd.f32 %v110, %v122
    %vm127 = vcmask 15368
    %128 = vst.msk [vmem:[#allocation2] sm:$0xff] %vm127, %v123
    %129 = vst.msk [vmem:[#allocation2 + $0x8] sm:$0xff] %vm127, %v124
    %130 = vst.msk [vmem:[#allocation2 + $0x10] sm:$0xff] %vm127, %v125
    %131 = vst.msk [vmem:[#allocation2 + $0x18] sm:$0xff] %vm127, %v126
    %v132 = vld [vmem:[#allocation3] sm:$0xff]
    %v133 = vld [vmem:[#allocation3 + $0x8] sm:$0xff]
    %v134 = vld [vmem:[#allocation3 + $0x10] sm:$0xff]
    %v135 = vld [vmem:[#allocation3 + $0x18] sm:$0xff]
    %v136 = vmax.f32 %v99, %v100
    %137 = vmax.xlane.f32.xlu0 %v136
    %v138 = vpop.xlane.xlu0 %137
    %v139 = vmax.f32 %v101, %v102
    %140 = vmax.xlane.f32.xlu0 %v139
    %v141 = vpop.xlane.xlu0 %140
    %v142 = vmax.f32 %v103, %v104
    %143 = vmax.xlane.f32.xlu0 %v142
    %v144 = vpop.xlane.xlu0 %143
    %v145 = vmax.f32 %v105, %v106
    %146 = vmax.xlane.f32.xlu0 %v145
    %v147 = vpop.xlane.xlu0 %146
    %v148 = vmax.f32 %v132, %v138
    %v149 = vmax.f32 %v133, %v141
    %v150 = vmax.f32 %v134, %v144
    %v151 = vmax.f32 %v135, %v147
    %152 = vst.msk [vmem:[#allocation3] sm:$0xff] %vm127, %v148
    %153 = vst.msk [vmem:[#allocation3 + $0x8] sm:$0xff] %vm127, %v149
    %154 = vst.msk [vmem:[#allocation3 + $0x10] sm:$0xff] %vm127, %v150
    %155 = vst.msk [vmem:[#allocation3 + $0x18] sm:$0xff] %vm127, %v151
    // Predicated region
    $region22: #{tpu_custom_call.1} parent=1 // pred_check
      %p156 = pneg %p28
    $region23: #{tpu_custom_call.1} parent=1 // pred_check_branch
      %158 = sbr.rel (%p156) target = $region25
    $region24: #{tpu_custom_call.1} parent=1 // pred_region
      %v159 = vld [vmem:[#allocation2] sm:$0xff]
      %v160 = vld [vmem:[#allocation2 + $0x8] sm:$0xff]
      %v161 = vld [vmem:[#allocation2 + $0x10] sm:$0xff]
      %v162 = vld [vmem:[#allocation2 + $0x18] sm:$0xff]
      %v163 = vmul.f32 %v159, 0.00390625
      %v164 = vmul.f32 %v160, 0.00390625
      %v165 = vmul.f32 %v161, 0.00390625
      %v166 = vmul.f32 %v162, 0.00390625
      %v167 = vld [vmem:[#allocation3] sm:$0xff]
      %v168 = vld [vmem:[#allocation3 + $0x8] sm:$0xff]
      %v169 = vld [vmem:[#allocation3 + $0x10] sm:$0xff]
      %v170 = vld [vmem:[#allocation3 + $0x18] sm:$0xff]
      %175 = vrot.lane.b32.xlu0 %v167, 2
      %v176 = vpop.permute.xlu0 %175
      %177 = vrot.lane.b32.xlu0 %v168, 2
      %v178 = vpop.permute.xlu0 %177
      %179 = vrot.lane.b32.xlu0 %v169, 2
      %v180 = vpop.permute.xlu0 %179
      %181 = vrot.lane.b32.xlu0 %v170, 2
      %v182 = vpop.permute.xlu0 %181
      %vm187 = vcmask 15360
      %v188 = vsel %vm187, %v163, %v176
      %v189 = vsel %vm187, %v164, %v178
      %v190 = vsel %vm187, %v165, %v180
      %v191 = vsel %vm187, %v166, %v182
      %v192 = vld [vmem:[%s1] sm:$0xff]
      %v193 = vld [vmem:[%s2] sm:$0xff]
      %v194 = vld [vmem:[%s2 + $0x8] sm:$0xff]
      %v195 = vld [vmem:[%s2 + $0x10] sm:$0xff]
      %v196 = vld [vmem:[%s2 + $0x18] sm:$0xff]
      %vm197 = vcmask 261120
      %v199 = vsel %vm197, %v192, 0
      %201 = vmatprep.subr.mxu0 0.0
      %202 = vmatpush1.msra.mxu0 %v188
      %203 = vmatprep.subr.mxu0 0.0
      %204 = vmatpush1.msra.mxu0 %v189
      %205 = vmatprep.subr.mxu0 0.0
      %206 = vmatpush1.msra.mxu0 %v190
      %207 = vmatprep.subr.mxu0 0.0
      %208 = vmatpush1.msra.mxu0 %v191
      %209 = vmatprep.subr.mxu0 0.0
      %210 = vmatpush1.msra.mxu0 0.0
      %211 = vmatprep.subr.mxu0 0.0
      %212 = vmatpush1.msra.mxu0 0.0
      %213 = vmatprep.subr.mxu0 0.0
      %214 = vmatpush1.msra.mxu0 0.0
      %215 = vmatprep.subr.mxu0 0.0
      %216 = vmatpush1.msra.mxu0 0.0
      %217 = vmatprep.subr.mxu0 0.0
      %218 = vmatpush1.msra.mxu0 0.0
      %219 = vmatprep.subr.mxu0 0.0
      %220 = vmatpush1.msra.mxu0 0.0
      %221 = vmatprep.subr.mxu0 0.0
      %222 = vmatpush1.msra.mxu0 0.0
      %223 = vmatprep.subr.mxu0 0.0
      %224 = vmatpush1.msra.mxu0 0.0
      %225 = vmatprep.subr.mxu0 0.0
      %226 = vmatpush1.msra.mxu0 0.0
      %227 = vmatprep.subr.mxu0 0.0
      %228 = vmatpush1.msra.mxu0 0.0
      %229 = vmatprep.subr.mxu0 0.0
      %230 = vmatpush1.msra.mxu0 0.0
      %231 = vmatprep.subr.mxu0 0.0
      %232 = vmatpush1.msra.mxu0 0.0
      %233 = vmatprep.subr.mxu0 0.0
      %234 = vmatpush1.msra.mxu0 0.0
      %235 = vmatprep.subr.mxu0 0.0
      %236 = vmatpush1.msra.mxu0 0.0
      %237 = vmatprep.subr.mxu0 0.0
      %238 = vmatpush1.msra.mxu0 0.0
      %239 = vmatprep.subr.mxu0 0.0
      %240 = vmatpush1.msra.mxu0 0.0
      %241 = vmatprep.subr.mxu0 0.0
      %242 = vmatpush1.msra.mxu0 0.0
      %243 = vmatprep.subr.mxu0 0.0
      %244 = vmatpush1.msra.mxu0 0.0
      %245 = vmatprep.subr.mxu0 0.0
      %246 = vmatpush1.msra.mxu0 0.0
      %247 = vmatprep.subr.mxu0 0.0
      %248 = vmatpush1.msra.mxu0 0.0
      %249 = vmatprep.subr.mxu0 0.0
      %250 = vmatpush1.msra.mxu0 0.0
      %251 = vmatprep.subr.mxu0 0.0
      %252 = vmatpush1.msra.mxu0 0.0
      %253 = vmatprep.subr.mxu0 0.0
      %254 = vmatpush1.msra.mxu0 0.0
      %255 = vmatprep.subr.mxu0 0.0
      %256 = vmatpush1.msra.mxu0 0.0
      %257 = vmatprep.subr.mxu0 0.0
      %258 = vmatpush1.msra.mxu0 0.0
      %259 = vmatprep.subr.mxu0 0.0
      %260 = vmatpush1.msra.mxu0 0.0
      %261 = vmatprep.subr.mxu0 0.0
      %262 = vmatpush1.msra.mxu0 0.0
      %263 = vmatprep.subr.mxu0 0.0
      %264 = vmatpush1.msra.mxu0 0.0
      %265 = vmatprep.mubr.f32.mxu0 0.0
      %266 = vmatmul.mubr.f32.gmra.mrb[0].mxu0 %v199
      %v267 = vpop.f32.mrb[0].mxu0
      %v268 = vadd.f32 0.0, %v267
      %v269 = vpop.f32.mrb[0].mxu0
      %270 = vdwg.mxu0
      %v271 = vmax.f32 %v268, 0.0
      %vm272 = vcmask 64512
      %v274 = vsel %vm272, %v193, 0
      %v277 = vsel %vm272, %v194, 0
      %v280 = vsel %vm272, %v195, 0
      %v283 = vsel %vm272, %v196, 0
      %285 = vmatprep.subr.mxu0 0.0
      %286 = vmatpush1.msra.mxu0 %v271
      %287 = vmatprep.subr.mxu0 0.0
      %288 = vmatpush1.msra.mxu0 0.0
      %289 = vmatprep.subr.mxu0 0.0
      %290 = vmatpush1.msra.mxu0 0.0
      %291 = vmatprep.subr.mxu0 0.0
      %292 = vmatpush1.msra.mxu0 0.0
      %293 = vmatprep.subr.mxu0 0.0
      %294 = vmatpush1.msra.mxu0 0.0
      %295 = vmatprep.subr.mxu0 0.0
      %296 = vmatpush1.msra.mxu0 0.0
      %297 = vmatprep.subr.mxu0 0.0
      %298 = vmatpush1.msra.mxu0 0.0
      %299 = vmatprep.subr.mxu0 0.0
      %300 = vmatpush1.msra.mxu0 0.0
      %301 = vmatprep.subr.mxu0 0.0
      %302 = vmatpush1.msra.mxu0 0.0
      %303 = vmatprep.subr.mxu0 0.0
      %304 = vmatpush1.msra.mxu0 0.0
      %305 = vmatprep.subr.mxu0 0.0
      %306 = vmatpush1.msra.mxu0 0.0
      %307 = vmatprep.subr.mxu0 0.0
      %308 = vmatpush1.msra.mxu0 0.0
      %309 = vmatprep.subr.mxu0 0.0
      %310 = vmatpush1.msra.mxu0 0.0
      %311 = vmatprep.subr.mxu0 0.0
      %312 = vmatpush1.msra.mxu0 0.0
      %313 = vmatprep.subr.mxu0 0.0
      %314 = vmatpush1.msra.mxu0 0.0
      %315 = vmatprep.subr.mxu0 0.0
      %316 = vmatpush1.msra.mxu0 0.0
      %317 = vmatprep.subr.mxu0 0.0
      %318 = vmatpush1.msra.mxu0 0.0
      %319 = vmatprep.subr.mxu0 0.0
      %320 = vmatpush1.msra.mxu0 0.0
      %321 = vmatprep.subr.mxu0 0.0
      %322 = vmatpush1.msra.mxu0 0.0
      %323 = vmatprep.subr.mxu0 0.0
      %324 = vmatpush1.msra.mxu0 0.0
      %325 = vmatprep.subr.mxu0 0.0
      %326 = vmatpush1.msra.mxu0 0.0
      %327 = vmatprep.subr.mxu0 0.0
      %328 = vmatpush1.msra.mxu0 0.0
      %329 = vmatprep.subr.mxu0 0.0
      %330 = vmatpush1.msra.mxu0 0.0
      %331 = vmatprep.subr.mxu0 0.0
      %332 = vmatpush1.msra.mxu0 0.0
      %333 = vmatprep.subr.mxu0 0.0
      %334 = vmatpush1.msra.mxu0 0.0
      %335 = vmatprep.subr.mxu0 0.0
      %336 = vmatpush1.msra.mxu0 0.0
      %337 = vmatprep.subr.mxu0 0.0
      %338 = vmatpush1.msra.mxu0 0.0
      %339 = vmatprep.subr.mxu0 0.0
      %340 = vmatpush1.msra.mxu0 0.0
      %341 = vmatprep.subr.mxu0 0.0
      %342 = vmatpush1.msra.mxu0 0.0
      %343 = vmatprep.subr.mxu0 0.0
      %344 = vmatpush1.msra.mxu0 0.0
      %345 = vmatprep.subr.mxu0 0.0
      %346 = vmatpush1.msra.mxu0 0.0
      %347 = vmatprep.subr.mxu0 0.0
      %348 = vmatpush1.msra.mxu0 0.0
      %349 = vmatprep.mubr.f32.mxu0 0.0
      %350 = vmatmul.mubr.f32.gmra.mrb[0].mxu0 %v274
      %v351 = vpop.f32.mrb[0].mxu0
      %v352 = vadd.f32 0.0, %v351
      %v353 = vpop.f32.mrb[0].mxu0
      %354 = vmatprep.mubr.f32.mxu0 0.0
      %355 = vmatmul.mubr.f32.gmra.mrb[0].mxu0 %v277
      %v356 = vpop.f32.mrb[0].mxu0
      %v357 = vadd.f32 0.0, %v356
      %v358 = vpop.f32.mrb[0].mxu0
      %359 = vmatprep.mubr.f32.mxu0 0.0
      %360 = vmatmul.mubr.f32.gmra.mrb[0].mxu0 %v280
      %v361 = vpop.f32.mrb[0].mxu0
      %v362 = vadd.f32 0.0, %v361
      %v363 = vpop.f32.mrb[0].mxu0
      %364 = vmatprep.mubr.f32.mxu0 0.0
      %365 = vmatmul.mubr.f32.gmra.mrb[0].mxu0 %v283
      %v366 = vpop.f32.mrb[0].mxu0
      %v367 = vadd.f32 0.0, %v366
      %v368 = vpop.f32.mrb[0].mxu0
      %369 = vdwg.mxu0
      %374 = vrot.lane.b32.xlu0 %v352, 126
      %v375 = vpop.permute.xlu0 %374
      %376 = vrot.lane.b32.xlu0 %v357, 126
      %v377 = vpop.permute.xlu0 %376
      %378 = vrot.lane.b32.xlu0 %v362, 126
      %v379 = vpop.permute.xlu0 %378
      %380 = vrot.lane.b32.xlu0 %v367, 126
      %v381 = vpop.permute.xlu0 %380
      %v386 = vadd.f32 %v352, %v375
      %v387 = vadd.f32 %v357, %v377
      %v388 = vadd.f32 %v362, %v379
      %v389 = vadd.f32 %v367, %v381
      %v390 = vxor.u32 %v386, 2147483648
      %v391 = vxor.u32 %v387, 2147483648
      %v392 = vxor.u32 %v388, 2147483648
      %v393 = vxor.u32 %v389, 2147483648
      %v394 = vmul.f32 %v390, 1.442695
      %v395 = vpow.pop %v394
      %v396 = vmul.f32 %v391, 1.442695
      %v397 = vpow.pop %v396
      %v398 = vmul.f32 %v392, 1.442695
      %v399 = vpow.pop %v398
      %v400 = vmul.f32 %v393, 1.442695
      %v401 = vpow.pop %v400
      %v402 = vadd.f32 %v395, 1.0
      %v403 = vadd.f32 %v397, 1.0
      %v404 = vadd.f32 %v399, 1.0
      %v405 = vadd.f32 %v401, 1.0
      %v406 = vrcp.pop %v402
      %v407 = vmul.f32 1.0, %v406
      %v408 = vrcp.pop %v403
      %v409 = vmul.f32 1.0, %v408
      %v410 = vrcp.pop %v404
      %v411 = vmul.f32 1.0, %v410
      %v412 = vrcp.pop %v405
      %v413 = vmul.f32 1.0, %v412
      %414 = vst.msk [vmem:[%s3] sm:$0xff] %vm69, %v407
      %415 = vst.msk [vmem:[%s3 + $0x8] sm:$0xff] %vm69, %v409
      %416 = vst.msk [vmem:[%s3 + $0x10] sm:$0xff] %vm69, %v411
      %417 = vst.msk [vmem:[%s3 + $0x18] sm:$0xff] %vm69, %v413
      %422 = vrot.lane.b32.xlu0 %v407, 127
      %v423 = vpop.permute.xlu0 %422
      %424 = vrot.lane.b32.xlu0 %v409, 127
      %v425 = vpop.permute.xlu0 %424
      %426 = vrot.lane.b32.xlu0 %v411, 127
      %v427 = vpop.permute.xlu0 %426
      %428 = vrot.lane.b32.xlu0 %v413, 127
      %v429 = vpop.permute.xlu0 %428
      %s434 = scalar_lea.vmem %s3, 32
      %435 = vst.msk [vmem:[%s434] sm:$0xff] %vm69, %v423
      %436 = vst.msk [vmem:[%s434 + $0x8] sm:$0xff] %vm69, %v425
      %437 = vst.msk [vmem:[%s434 + $0x10] sm:$0xff] %vm69, %v427
      %438 = vst.msk [vmem:[%s434 + $0x18] sm:$0xff] %vm69, %v429
    $region25: #{tpu_custom_call.1} parent=1 // pred_fallthru
      _
    // Predicated region
    $region26: #{tpu_custom_call.1} parent=1 // pred_check
      _
    $region27: #{tpu_custom_call.1} parent=1 // pred_check_branch
      %440 = sbr.rel (0) target = $region29
    $region28: #{tpu_custom_call.1} parent=1 // pred_region
      _
    $region29: #{tpu_custom_call.1} parent=1 // pred_fallthru
      _
    // Predicated region
    $region30: #{tpu_custom_call.1} parent=1 // pred_check
      _
    $region31: #{tpu_custom_call.1} parent=1 // pred_check_branch
      %442 = sbr.rel (0) target = $region33
    $region32: #{tpu_custom_call.1} parent=1 // pred_region
      _
    $region33: #{tpu_custom_call.1} parent=1 // pred_fallthru
      _
    %443 = vsyncpa [#allocation5], 1

</llo_original>
